<compile_context>
chip_gen: v5e
topology: v5e:2x2
jax: 0.10.0
libtpu: 0.0.40
codegen_flags: <defaults>
</compile_context>

<pallas_src>
import functools
import math

import jax
import jax.numpy as jnp
from jax import lax
from jax.experimental import pallas as pl
from jax.experimental.pallas import tpu as pltpu

_LN_EPS = 1e-5
_BN_EPS = 1e-5


# ----------------------------- pass 1 kernel --------------------------------
def _pass1_kernel(x_ref, ln_g_ref, ln_b_ref, w1a_ref, w1b_ref, dw_ref,
                  dconv_ref, stats_ref, *, seq_len):
    """One group of batch elements, flattened to (R, E) rows with R = bb*T:
    LayerNorm -> conv1 (two GLU halves on the MXU) -> GLU -> depthwise conv
    over time (per-sequence, SAME zero padding).  Writes dconv rows and the
    group's BatchNorm partial sums."""
    R = x_ref.shape[0]                                     # bb * T rows
    C = w1a_ref.shape[1]
    K = dw_ref.shape[0]
    pad = (K - 1) // 2

    x = x_ref[...].astype(jnp.float32)                     # (R, E)

    # --- LayerNorm over embedding dim (biased variance, eps=1e-5) ---
    mu = jnp.mean(x, axis=-1, keepdims=True)
    var = jnp.mean((x - mu) ** 2, axis=-1, keepdims=True)
    xn = (x - mu) * lax.rsqrt(var + _LN_EPS)
    xn = xn * ln_g_ref[...] + ln_b_ref[...]                # (1, E) params broadcast

    # --- pointwise_conv1 as two lane-aligned matmuls (the GLU halves) ---
    # bf16 operands feed the MXU, accumulation stays f32; no lane-slice needed.
    xn_b = xn.astype(jnp.bfloat16)
    a = jnp.dot(xn_b, w1a_ref[...], preferred_element_type=jnp.float32)   # (R, C)
    b = jnp.dot(xn_b, w1b_ref[...], preferred_element_type=jnp.float32)   # (R, C)
    g = a * jax.nn.sigmoid(b)                              # GLU, f32 (R, C)

    # --- depthwise conv over time, SAME zero padding, via XLU rolls + masks ---
    # Rows are bb sequences of length T laid back-to-back.  For a valid tap
    # (0 <= t+off < T) the rolled source row stays inside the same sequence,
    # so cross-sequence rows only ever appear where the mask zeroes them.
    dw = dw_ref[...]                                       # (K, C) f32
    t_idx = lax.broadcasted_iota(jnp.int32, (R, C), 0)
    if R != seq_len:                                       # static at trace time
        t_idx = t_idx % seq_len                            # within-sequence time index
    dconv = g * dw[pad:pad + 1, :]                         # center tap, no shift
    for k in range(K):                                     # static, K small
        off = k - pad
        if off == 0:
            continue
        shifted = pltpu.roll(g, (-off) % R, axis=0)        # shifted[r] = g[(r+off) mod R]
        valid = jnp.logical_and(t_idx + off >= 0, t_idx + off < seq_len)
        dconv = dconv + jnp.where(valid, shifted, 0.0) * dw[k:k + 1, :]

    dconv_ref[...] = dconv.astype(dconv_ref.dtype)

    # --- per-group partial sums for the global BatchNorm statistics ---
    s1 = jnp.sum(dconv, axis=0, keepdims=True)             # (1, C)
    s2 = jnp.sum(dconv * dconv, axis=0, keepdims=True)     # (1, C)
    stats_ref[0] = jnp.concatenate([s1, s2], axis=0)       # (2, C)


# ----------------------------- pass 2 kernel --------------------------------
def _pass2_kernel(dconv_ref, scale_ref, shift_ref, w2_ref, o_ref):
    """Row tile of the flattened (B*T, C) slab: BatchNorm (precomputed
    scale/shift) -> SiLU -> pointwise_conv2 on the MXU."""
    h = dconv_ref[...].astype(jnp.float32) * scale_ref[...] + shift_ref[...]
    h = h * jax.nn.sigmoid(h)                              # SiLU / swish
    out = jnp.dot(h.astype(jnp.bfloat16), w2_ref[...],
                  preferred_element_type=jnp.float32)      # (tm, E)
    o_ref[...] = out.astype(o_ref.dtype)


# ----------------------------- wrappers --------------------------------------
def prepare_params(ln_g, ln_b, w1, dw, bn_g, bn_b, w2):
    """One-time weight re-layout (call OUTSIDE the step function):
       - 1x1-conv weights transposed to (in, out) matmul form, cast to bf16
       - w1 split into the two GLU halves so the kernel never lane-slices
       - depthwise weight laid out as (K, C)."""
    two_c, E = w1.shape
    C = two_c // 2
    K = dw.shape[-1]
    assert K % 2 == 1, "depthwise kernel_size must be odd for SAME padding"
    w1t = jnp.transpose(jnp.asarray(w1, jnp.float32)).astype(jnp.bfloat16)   # (E, 2C)
    return dict(
        ln_g=jnp.asarray(ln_g, jnp.float32).reshape(1, E),
        ln_b=jnp.asarray(ln_b, jnp.float32).reshape(1, E),
        w1a=w1t[:, :C],                                     # (E, C) bf16
        w1b=w1t[:, C:],                                     # (E, C) bf16
        dw=jnp.transpose(jnp.asarray(dw, jnp.float32)[:, 0, :]),   # (K, C) f32
        bn_g=jnp.asarray(bn_g, jnp.float32),
        bn_b=jnp.asarray(bn_b, jnp.float32),
        w2=jnp.transpose(jnp.asarray(w2, jnp.float32)).astype(jnp.bfloat16),  # (C, E)
    )


def _pick_batch_group(B, T, target_rows=512):
    """Largest bb dividing B with bb*T <= target_rows (>=1).  Keeps pass-1
    blocks batch-aligned (no ragged reads into the BN partial sums) while
    growing the per-step matmul M-dim and amortizing per-step overhead."""
    bb = 1
    for cand in range(1, B + 1):
        if B % cand == 0 and cand * T <= target_rows:
            bb = cand
    return bb


def _pick_row_tile(m, target=512):
    """Largest multiple-of-8 divisor of m not exceeding `target` (or m if small)."""
    if m <= target:
        return m
    for tm in range(target, 7, -8):
        if m % tm == 0:
            return tm
    return target   # ragged last block; Pallas masks the out-of-bounds rows


@jax.jit
def conv_module_forward(x, params):
    """x: (B, T, E) float32.  params: output of prepare_params()."""
    B, T, E = x.shape
    C = params["w2"].shape[0]
    K = params["dw"].shape[0]
    M = B * T

    cparams = pltpu.CompilerParams(
        dimension_semantics=("parallel",),
        vmem_limit_bytes=32 * 1024 * 1024,
    )

    bb = _pick_batch_group(B, T)        # batch elements per pass-1 grid step
    R = bb * T                          # rows per pass-1 block
    G = B // bb                         # pass-1 grid length

    # ---- pass 1: LN -> conv1/GLU -> depthwise conv + BN partial sums ----
    xf = x.reshape(M, E)                # contiguous reshape, free
    dconv, stats = pl.pallas_call(
        functools.partial(_pass1_kernel, seq_len=T),
        grid=(G,),
        in_specs=[
            pl.BlockSpec((R, E), lambda i: (i, 0)),         # x row-group tile
            pl.BlockSpec((1, E), lambda i: (0, 0)),         # ln gamma
            pl.BlockSpec((1, E), lambda i: (0, 0)),         # ln beta
            pl.BlockSpec((E, C), lambda i: (0, 0)),         # w1 half A (bf16)
            pl.BlockSpec((E, C), lambda i: (0, 0)),         # w1 half B (bf16)
            pl.BlockSpec((K, C), lambda i: (0, 0)),         # depthwise weight
        ],
        out_specs=[
            pl.BlockSpec((R, C), lambda i: (i, 0)),         # dconv rows
            pl.BlockSpec((1, 2, C), lambda i: (i, 0, 0)),   # [sum; sum_sq] per group
        ],
        out_shape=[
            jax.ShapeDtypeStruct((M, C), jnp.float32),
            jax.ShapeDtypeStruct((G, 2, C), jnp.float32),
        ],
        compiler_params=cparams,
    )(xf, params["ln_g"], params["ln_b"], params["w1a"], params["w1b"], params["dw"])

    # ---- tiny global reduce for training-mode BatchNorm statistics ----
    n = jnp.float32(M)
    total = jnp.sum(stats, axis=0)                          # (2, C)
    mean = total[0] / n
    var = jnp.maximum(total[1] / n - mean * mean, 0.0)      # biased variance
    scale = params["bn_g"] * lax.rsqrt(var + _BN_EPS)       # (C,)
    shift = params["bn_b"] - mean * scale                   # (C,)

    # ---- pass 2: BN -> SiLU -> pointwise_conv2, row-tiled over flattened B*T ----
    tm = _pick_row_tile(M)
    out = pl.pallas_call(
        _pass2_kernel,
        grid=(pl.cdiv(M, tm),),
        in_specs=[
            pl.BlockSpec((tm, C), lambda i: (i, 0)),        # dconv row tile
            pl.BlockSpec((1, C), lambda i: (0, 0)),         # bn scale
            pl.BlockSpec((1, C), lambda i: (0, 0)),         # bn shift
            pl.BlockSpec((C, E), lambda i: (0, 0)),         # w2 (bf16)
        ],
        out_specs=pl.BlockSpec((tm, E), lambda i: (i, 0)),
        out_shape=jax.ShapeDtypeStruct((M, E), x.dtype),
        compiler_params=cparams,
    )(dconv, scale.reshape(1, C), shift.reshape(1, C), params["w2"])

    return out.reshape(B, T, E)


# ----------------------------- pure-JAX reference ----------------------------
def conv_module_ref(x, ln_g, ln_b, w1, dw, bn_g, bn_b, w2,
                    matmul_dtype=jnp.float32):
    """Reference mirroring PyTorch ConvolutionModule.forward (training mode,
    dropout = identity).  `matmul_dtype=jnp.bfloat16` mirrors the kernel's
    bf16-operand / f32-accumulate MXU policy."""
    B, T, E = x.shape
    C = w2.shape[1]
    K = dw.shape[-1]
    pad = (K - 1) // 2
    x = x.astype(jnp.float32)
    mu = x.mean(-1, keepdims=True)
    var = ((x - mu) ** 2).mean(-1, keepdims=True)
    xn = (x - mu) * lax.rsqrt(var + _LN_EPS) * ln_g + ln_b
    y = jnp.einsum('bte,oe->bto', xn.astype(matmul_dtype), w1.astype(matmul_dtype),
                   preferred_element_type=jnp.float32)
    g = y[..., :C] * jax.nn.sigmoid(y[..., C:])
    gp = jnp.pad(g, ((0, 0), (pad, pad), (0, 0)))
    dconv = jnp.zeros((B, T, C), jnp.float32)
    for k in range(K):
        dconv = dconv + gp[:, k:k + T, :] * dw[:, 0, k][None, None, :]
    bmu = dconv.mean(axis=(0, 1), keepdims=True)
    bvar = ((dconv - bmu) ** 2).mean(axis=(0, 1), keepdims=True)
    h = (dconv - bmu) * lax.rsqrt(bvar + _BN_EPS) * bn_g + bn_b
    h = h * jax.nn.sigmoid(h)
    return jnp.einsum('btc,ec->bte', h.astype(matmul_dtype), w2.astype(matmul_dtype),
                      preferred_element_type=jnp.float32)


if __name__ == "__main__":
    # Small shapes consistent with the module: B x T x embed_dim input.
    B, T, E, C, K = 2, 16, 32, 16, 3      # embed_dim=32, channels=16, kernel=3

    key = jax.random.PRNGKey(0)
    k_x, k_w1, k_dw, k_w2 = jax.random.split(key, 4)

    x = jax.random.normal(k_x, (B, T, E), jnp.float32)

    # Deterministic params (module defaults: bias=False, LN/BN affine = 1/0).
    ln_g = jnp.ones((E,), jnp.float32)
    ln_b = jnp.zeros((E,), jnp.float32)
    w1 = jax.random.normal(k_w1, (2 * C, E), jnp.float32) * (1.0 / math.sqrt(E))
    dw = jax.random.normal(k_dw, (C, 1, K), jnp.float32) * (1.0 / math.sqrt(K))
    bn_g = jnp.ones((C,), jnp.float32)
    bn_b = jnp.zeros((C,), jnp.float32)
    w2 = jax.random.normal(k_w2, (E, C), jnp.float32) * (1.0 / math.sqrt(C))

    params = prepare_params(ln_g, ln_b, w1, dw, bn_g, bn_b, w2)   # one-time re-layout
    out = conv_module_forward(x, params)
    out = jax.block_until_ready(out)

    assert out.shape == (B, T, E)
    assert bool(jnp.all(jnp.isfinite(out)))

    # Tight check against a reference with the SAME bf16-operand MXU policy.
    ref_bf = conv_module_ref(x, ln_g, ln_b, w1, dw, bn_g, bn_b, w2,
                             matmul_dtype=jnp.bfloat16)
    assert bool(jnp.allclose(out, ref_bf, atol=5e-3, rtol=5e-3)), \
        "mismatch vs bf16-matmul reference"

    # Loose sanity check against the full-f32 PyTorch-semantics reference
    # (differences come only from bf16 MXU operand rounding).
    ref_f32 = conv_module_ref(x, ln_g, ln_b, w1, dw, bn_g, bn_b, w2)
    assert bool(jnp.allclose(out, ref_f32, atol=1e-1, rtol=1e-1)), \
        "mismatch vs f32 reference"

    print("KERNEL_OK")
</pallas_src>

<mosaic_0001>
module attributes {stable_mosaic.version = 11 : i64} {
  func.func @_pass1_kernel(%arg0: i32, %arg1: memref<32x32xf32, #tpu.memory_space<vmem>>, %arg2: memref<1x32xf32, #tpu.memory_space<vmem>>, %arg3: memref<1x32xf32, #tpu.memory_space<vmem>>, %arg4: memref<32x16xbf16, #tpu.memory_space<vmem>>, %arg5: memref<32x16xbf16, #tpu.memory_space<vmem>>, %arg6: memref<3x16xf32, #tpu.memory_space<vmem>>, %arg7: memref<32x16xf32, #tpu.memory_space<vmem>>, %arg8: memref<1x2x16xf32, #tpu.memory_space<vmem>>) attributes {dimension_semantics = [#tpu.dimension_semantics<parallel>], iteration_bounds = array<i64: 1>, scalar_prefetch = 0 : i64, scratch_operands = 0 : i64, tpu.core_type = #tpu.core_type<tc>, window_params = [{transform_indices = @transform_0, window_bounds = array<i64: 32, 32>}, {pipeline_mode = #tpu.pipeline_mode<synchronous>, transform_indices = @transform_1, window_bounds = array<i64: 1, 32>}, {pipeline_mode = #tpu.pipeline_mode<synchronous>, transform_indices = @transform_2, window_bounds = array<i64: 1, 32>}, {pipeline_mode = #tpu.pipeline_mode<synchronous>, transform_indices = @transform_3, window_bounds = array<i64: 32, 16>}, {pipeline_mode = #tpu.pipeline_mode<synchronous>, transform_indices = @transform_4, window_bounds = array<i64: 32, 16>}, {pipeline_mode = #tpu.pipeline_mode<synchronous>, transform_indices = @transform_5, window_bounds = array<i64: 3, 16>}, {transform_indices = @transform_6, window_bounds = array<i64: 32, 16>}, {transform_indices = @transform_7, window_bounds = array<i64: 1, 2, 16>}]} {
    %c0 = arith.constant 0 : index
    %c0_0 = arith.constant 0 : index
    %0 = vector.load %arg1[%c0, %c0_0] : memref<32x32xf32, #tpu.memory_space<vmem>>, vector<32x32xf32>
    %cst = arith.constant dense<0.000000e+00> : vector<32xf32>
    %1 = vector.multi_reduction <add>, %0, %cst [1] : vector<32x32xf32> to vector<32xf32>
    %2 = vector.shape_cast %1 : vector<32xf32> to vector<32x1xf32>
    %cst_1 = arith.constant 3.200000e+01 : f32
    %3 = vector.broadcast %cst_1 : f32 to vector<32x1xf32>
    %4 = arith.divf %2, %3 : vector<32x1xf32>
    %5 = vector.broadcast %4 : vector<32x1xf32> to vector<32x32xf32>
    %6 = arith.subf %0, %5 : vector<32x32xf32>
    %7 = arith.mulf %6, %6 : vector<32x32xf32>
    %cst_2 = arith.constant dense<0.000000e+00> : vector<32xf32>
    %8 = vector.multi_reduction <add>, %7, %cst_2 [1] : vector<32x32xf32> to vector<32xf32>
    %9 = vector.shape_cast %8 : vector<32xf32> to vector<32x1xf32>
    %cst_3 = arith.constant 3.200000e+01 : f32
    %10 = vector.broadcast %cst_3 : f32 to vector<32x1xf32>
    %11 = arith.divf %9, %10 : vector<32x1xf32>
    %12 = vector.broadcast %4 : vector<32x1xf32> to vector<32x32xf32>
    %13 = arith.subf %0, %12 : vector<32x32xf32>
    %cst_4 = arith.constant 9.99999974E-6 : f32
    %14 = vector.broadcast %cst_4 : f32 to vector<32x1xf32>
    %15 = arith.addf %11, %14 : vector<32x1xf32>
    %16 = math.rsqrt %15 : vector<32x1xf32>
    %17 = vector.broadcast %16 : vector<32x1xf32> to vector<32x32xf32>
    %18 = arith.mulf %13, %17 : vector<32x32xf32>
    %c0_5 = arith.constant 0 : index
    %c0_6 = arith.constant 0 : index
    %19 = vector.load %arg2[%c0_5, %c0_6] : memref<1x32xf32, #tpu.memory_space<vmem>>, vector<1x32xf32>
    %20 = vector.broadcast %19 : vector<1x32xf32> to vector<32x32xf32>
    %21 = arith.mulf %18, %20 : vector<32x32xf32>
    %c0_7 = arith.constant 0 : index
    %c0_8 = arith.constant 0 : index
    %22 = vector.load %arg3[%c0_7, %c0_8] : memref<1x32xf32, #tpu.memory_space<vmem>>, vector<1x32xf32>
    %23 = vector.broadcast %22 : vector<1x32xf32> to vector<32x32xf32>
    %24 = arith.addf %21, %23 : vector<32x32xf32>
    %25 = arith.truncf %24 : vector<32x32xf32> to vector<32x32xbf16>
    %c0_9 = arith.constant 0 : index
    %c0_10 = arith.constant 0 : index
    %26 = vector.load %arg4[%c0_9, %c0_10] : memref<32x16xbf16, #tpu.memory_space<vmem>>, vector<32x16xbf16>
    %cst_11 = arith.constant dense<0.000000e+00> : vector<32x16xf32>
    %27 = tpu.matmul %25, %26, %cst_11 {dimension_numbers = #tpu.dot_dimension_numbers<[1], [0], [0], [1], [0, 0, 1, 1], [], []>} : vector<32x32xbf16>, vector<32x16xbf16>, vector<32x16xf32> -> vector<32x16xf32>
    %c0_12 = arith.constant 0 : index
    %c0_13 = arith.constant 0 : index
    %28 = vector.load %arg5[%c0_12, %c0_13] : memref<32x16xbf16, #tpu.memory_space<vmem>>, vector<32x16xbf16>
    %cst_14 = arith.constant dense<0.000000e+00> : vector<32x16xf32>
    %29 = tpu.matmul %25, %28, %cst_14 {dimension_numbers = #tpu.dot_dimension_numbers<[1], [0], [0], [1], [0, 0, 1, 1], [], []>} : vector<32x32xbf16>, vector<32x16xbf16>, vector<32x16xf32> -> vector<32x16xf32>
    %30 = arith.negf %29 : vector<32x16xf32>
    %31 = math.exp %30 : vector<32x16xf32>
    %cst_15 = arith.constant 1.000000e+00 : f32
    %32 = vector.broadcast %cst_15 : f32 to vector<32x16xf32>
    %33 = arith.addf %32, %31 : vector<32x16xf32>
    %34 = arith.divf %32, %33 : vector<32x16xf32>
    %35 = arith.mulf %27, %34 : vector<32x16xf32>
    %c0_16 = arith.constant 0 : index
    %c0_17 = arith.constant 0 : index
    %36 = vector.load %arg6[%c0_16, %c0_17] : memref<3x16xf32, #tpu.memory_space<vmem>>, vector<3x16xf32>
    %37 = tpu.iota {dimensions = array<i32: 0>} : vector<32x16xi32>
    %c16_i32 = arith.constant 16 : i32
    %c0_i32 = arith.constant 0 : i32
    %38 = arith.cmpi eq, %c16_i32, %c0_i32 : i32
    %c1_i32 = arith.constant 1 : i32
    %39 = arith.select %38, %c1_i32, %c16_i32 : i32
    %40 = vector.broadcast %39 : i32 to vector<32x16xi32>
    %41 = arith.remsi %37, %40 : vector<32x16xi32>
    %c0_i32_18 = arith.constant 0 : i32
    %42 = vector.broadcast %c0_i32_18 : i32 to vector<32x16xi32>
    %43 = arith.cmpi ne, %41, %42 : vector<32x16xi32>
    %c0_i32_19 = arith.constant 0 : i32
    %44 = vector.broadcast %c0_i32_19 : i32 to vector<32x16xi32>
    %45 = arith.cmpi slt, %41, %44 : vector<32x16xi32>
    %c0_i32_20 = arith.constant 0 : i32
    %46 = arith.cmpi slt, %39, %c0_i32_20 : i32
    %47 = vector.broadcast %46 : i1 to vector<32x16xi1>
    %48 = vector.broadcast %47 : vector<32x16xi1> to vector<32x16xi1>
    %49 = arith.xori %45, %48 : vector<32x16xi1>
    %50 = arith.andi %49, %43 : vector<32x16xi1>
    %51 = vector.broadcast %39 : i32 to vector<32x16xi32>
    %52 = arith.addi %41, %51 : vector<32x16xi32>
    %53 = arith.select %50, %52, %41 : vector<32x16xi1>, vector<32x16xi32>
    %54 = vector.extract_strided_slice %36 {offsets = [1, 0], sizes = [1, 16], strides = [1, 1]} : vector<3x16xf32> to vector<1x16xf32>
    %55 = vector.broadcast %54 : vector<1x16xf32> to vector<32x16xf32>
    %56 = arith.mulf %35, %55 : vector<32x16xf32>
    %c1_i32_21 = arith.constant 1 : i32
    %57 = tpu.dynamic_rotate %35 by %c1_i32_21 dim 0 : vector<32x16xf32>, i32 -> vector<32x16xf32>
    %c-1_i32 = arith.constant -1 : i32
    %58 = vector.broadcast %c-1_i32 : i32 to vector<32x16xi32>
    %59 = arith.addi %53, %58 : vector<32x16xi32>
    %c0_i32_22 = arith.constant 0 : i32
    %60 = vector.broadcast %c0_i32_22 : i32 to vector<32x16xi32>
    %61 = arith.cmpi sge, %59, %60 : vector<32x16xi32>
    %c-1_i32_23 = arith.constant -1 : i32
    %62 = vector.broadcast %c-1_i32_23 : i32 to vector<32x16xi32>
    %63 = arith.addi %53, %62 : vector<32x16xi32>
    %c16_i32_24 = arith.constant 16 : i32
    %64 = vector.broadcast %c16_i32_24 : i32 to vector<32x16xi32>
    %65 = arith.cmpi slt, %63, %64 : vector<32x16xi32>
    %66 = arith.andi %61, %65 : vector<32x16xi1>
    %cst_25 = arith.constant 0.000000e+00 : f32
    %67 = vector.broadcast %cst_25 : f32 to vector<32x16xf32>
    %68 = arith.select %66, %57, %67 : vector<32x16xi1>, vector<32x16xf32>
    %69 = vector.extract_strided_slice %36 {offsets = [0, 0], sizes = [1, 16], strides = [1, 1]} : vector<3x16xf32> to vector<1x16xf32>
    %70 = vector.broadcast %69 : vector<1x16xf32> to vector<32x16xf32>
    %71 = arith.mulf %68, %70 : vector<32x16xf32>
    %72 = arith.addf %56, %71 : vector<32x16xf32>
    %c31_i32 = arith.constant 31 : i32
    %73 = tpu.dynamic_rotate %35 by %c31_i32 dim 0 : vector<32x16xf32>, i32 -> vector<32x16xf32>
    %c1_i32_26 = arith.constant 1 : i32
    %74 = vector.broadcast %c1_i32_26 : i32 to vector<32x16xi32>
    %75 = arith.addi %53, %74 : vector<32x16xi32>
    %c0_i32_27 = arith.constant 0 : i32
    %76 = vector.broadcast %c0_i32_27 : i32 to vector<32x16xi32>
    %77 = arith.cmpi sge, %75, %76 : vector<32x16xi32>
    %c1_i32_28 = arith.constant 1 : i32
    %78 = vector.broadcast %c1_i32_28 : i32 to vector<32x16xi32>
    %79 = arith.addi %53, %78 : vector<32x16xi32>
    %c16_i32_29 = arith.constant 16 : i32
    %80 = vector.broadcast %c16_i32_29 : i32 to vector<32x16xi32>
    %81 = arith.cmpi slt, %79, %80 : vector<32x16xi32>
    %82 = arith.andi %77, %81 : vector<32x16xi1>
    %cst_30 = arith.constant 0.000000e+00 : f32
    %83 = vector.broadcast %cst_30 : f32 to vector<32x16xf32>
    %84 = arith.select %82, %73, %83 : vector<32x16xi1>, vector<32x16xf32>
    %85 = vector.extract_strided_slice %36 {offsets = [2, 0], sizes = [1, 16], strides = [1, 1]} : vector<3x16xf32> to vector<1x16xf32>
    %86 = vector.broadcast %85 : vector<1x16xf32> to vector<32x16xf32>
    %87 = arith.mulf %84, %86 : vector<32x16xf32>
    %88 = arith.addf %72, %87 : vector<32x16xf32>
    %c0_31 = arith.constant 0 : index
    %c0_32 = arith.constant 0 : index
    %89 = vector.load %arg7[%c0_31, %c0_32] : memref<32x16xf32, #tpu.memory_space<vmem>>, vector<32x16xf32>
    tpu.vector_store %arg7[%c0_31, %c0_32], %88 {strides = array<i32>} : memref<32x16xf32, #tpu.memory_space<vmem>>, vector<32x16xf32>,
    %cst_33 = arith.constant dense<0.000000e+00> : vector<16xf32>
    %90 = vector.multi_reduction <add>, %88, %cst_33 [0] : vector<32x16xf32> to vector<16xf32>
    %91 = vector.shape_cast %90 : vector<16xf32> to vector<1x16xf32>
    %92 = arith.mulf %88, %88 : vector<32x16xf32>
    %cst_34 = arith.constant dense<0.000000e+00> : vector<16xf32>
    %93 = vector.multi_reduction <add>, %92, %cst_34 [0] : vector<32x16xf32> to vector<16xf32>
    %94 = vector.shape_cast %93 : vector<16xf32> to vector<1x16xf32>
    %95 = tpu.concatenate %91, %94 in 0 : vector<1x16xf32>, vector<1x16xf32> -> vector<2x16xf32>
    %c0_35 = arith.constant 0 : index
    %c0_36 = arith.constant 0 : index
    %c0_37 = arith.constant 0 : index
    %96 = vector.load %arg8[%c0_35, %c0_36, %c0_37] : memref<1x2x16xf32, #tpu.memory_space<vmem>>, vector<1x2x16xf32>
    %97 = vector.shape_cast %96 : vector<1x2x16xf32> to vector<2x16xf32>
    %98 = vector.shape_cast %95 : vector<2x16xf32> to vector<1x2x16xf32>
    tpu.vector_store %arg8[%c0_35, %c0_36, %c0_37], %98 {strides = array<i32>} : memref<1x2x16xf32, #tpu.memory_space<vmem>>, vector<1x2x16xf32>,
    return
  }
  func.func @transform_0(%arg0: i32) -> (i32, i32) {
    %c0_i32 = arith.constant 0 : i32
    %c0_i32_0 = arith.constant 0 : i32
    return %arg0, %c0_i32 : i32, i32
  }
  func.func @transform_1(%arg0: i32) -> (i32, i32) {
    %c0_i32 = arith.constant 0 : i32
    %c0_i32_0 = arith.constant 0 : i32
    %c0_i32_1 = arith.constant 0 : i32
    return %c0_i32, %c0_i32_0 : i32, i32
  }
  func.func @transform_2(%arg0: i32) -> (i32, i32) {
    %c0_i32 = arith.constant 0 : i32
    %c0_i32_0 = arith.constant 0 : i32
    %c0_i32_1 = arith.constant 0 : i32
    return %c0_i32, %c0_i32_0 : i32, i32
  }
  func.func @transform_3(%arg0: i32) -> (i32, i32) {
    %c0_i32 = arith.constant 0 : i32
    %c0_i32_0 = arith.constant 0 : i32
    %c0_i32_1 = arith.constant 0 : i32
    return %c0_i32, %c0_i32_0 : i32, i32
  }
  func.func @transform_4(%arg0: i32) -> (i32, i32) {
    %c0_i32 = arith.constant 0 : i32
    %c0_i32_0 = arith.constant 0 : i32
    %c0_i32_1 = arith.constant 0 : i32
    return %c0_i32, %c0_i32_0 : i32, i32
  }
  func.func @transform_5(%arg0: i32) -> (i32, i32) {
    %c0_i32 = arith.constant 0 : i32
    %c0_i32_0 = arith.constant 0 : i32
    %c0_i32_1 = arith.constant 0 : i32
    return %c0_i32, %c0_i32_0 : i32, i32
  }
  func.func @transform_6(%arg0: i32) -> (i32, i32) {
    %c0_i32 = arith.constant 0 : i32
    %c0_i32_0 = arith.constant 0 : i32
    return %arg0, %c0_i32 : i32, i32
  }
  func.func @transform_7(%arg0: i32) -> (i32, i32, i32) {
    %c0_i32 = arith.constant 0 : i32
    %c0_i32_0 = arith.constant 0 : i32
    %c0_i32_1 = arith.constant 0 : i32
    return %arg0, %c0_i32, %c0_i32_0 : i32, i32, i32
  }
}

module attributes {stable_mosaic.version = 11 : i64} {
  func.func @_pass2_kernel(%arg0: i32, %arg1: memref<32x16xf32, #tpu.memory_space<vmem>>, %arg2: memref<1x16xf32, #tpu.memory_space<vmem>>, %arg3: memref<1x16xf32, #tpu.memory_space<vmem>>, %arg4: memref<16x32xbf16, #tpu.memory_space<vmem>>, %arg5: memref<32x32xf32, #tpu.memory_space<vmem>>) attributes {dimension_semantics = [#tpu.dimension_semantics<parallel>], iteration_bounds = array<i64: 1>, scalar_prefetch = 0 : i64, scratch_operands = 0 : i64, tpu.core_type = #tpu.core_type<tc>, window_params = [{transform_indices = @transform_0, window_bounds = array<i64: 32, 16>}, {pipeline_mode = #tpu.pipeline_mode<synchronous>, transform_indices = @transform_1, window_bounds = array<i64: 1, 16>}, {pipeline_mode = #tpu.pipeline_mode<synchronous>, transform_indices = @transform_2, window_bounds = array<i64: 1, 16>}, {pipeline_mode = #tpu.pipeline_mode<synchronous>, transform_indices = @transform_3, window_bounds = array<i64: 16, 32>}, {transform_indices = @transform_4, window_bounds = array<i64: 32, 32>}]} {
    %c0 = arith.constant 0 : index
    %c0_0 = arith.constant 0 : index
    %0 = vector.load %arg1[%c0, %c0_0] : memref<32x16xf32, #tpu.memory_space<vmem>>, vector<32x16xf32>
    %c0_1 = arith.constant 0 : index
    %c0_2 = arith.constant 0 : index
    %1 = vector.load %arg2[%c0_1, %c0_2] : memref<1x16xf32, #tpu.memory_space<vmem>>, vector<1x16xf32>
    %2 = vector.broadcast %1 : vector<1x16xf32> to vector<32x16xf32>
    %3 = arith.mulf %0, %2 : vector<32x16xf32>
    %c0_3 = arith.constant 0 : index
    %c0_4 = arith.constant 0 : index
    %4 = vector.load %arg3[%c0_3, %c0_4] : memref<1x16xf32, #tpu.memory_space<vmem>>, vector<1x16xf32>
    %5 = vector.broadcast %4 : vector<1x16xf32> to vector<32x16xf32>
    %6 = arith.addf %3, %5 : vector<32x16xf32>
    %7 = arith.negf %6 : vector<32x16xf32>
    %8 = math.exp %7 : vector<32x16xf32>
    %cst = arith.constant 1.000000e+00 : f32
    %9 = vector.broadcast %cst : f32 to vector<32x16xf32>
    %10 = arith.addf %9, %8 : vector<32x16xf32>
    %11 = arith.divf %9, %10 : vector<32x16xf32>
    %12 = arith.mulf %6, %11 : vector<32x16xf32>
    %13 = arith.truncf %12 : vector<32x16xf32> to vector<32x16xbf16>
    %c0_5 = arith.constant 0 : index
    %c0_6 = arith.constant 0 : index
    %14 = vector.load %arg4[%c0_5, %c0_6] : memref<16x32xbf16, #tpu.memory_space<vmem>>, vector<16x32xbf16>
    %cst_7 = arith.constant dense<0.000000e+00> : vector<32x32xf32>
    %15 = tpu.matmul %13, %14, %cst_7 {dimension_numbers = #tpu.dot_dimension_numbers<[1], [0], [0], [1], [0, 0, 1, 1], [], []>} : vector<32x16xbf16>, vector<16x32xbf16>, vector<32x32xf32> -> vector<32x32xf32>
    %c0_8 = arith.constant 0 : index
    %c0_9 = arith.constant 0 : index
    %16 = vector.load %arg5[%c0_8, %c0_9] : memref<32x32xf32, #tpu.memory_space<vmem>>, vector<32x32xf32>
    tpu.vector_store %arg5[%c0_8, %c0_9], %15 {strides = array<i32>} : memref<32x32xf32, #tpu.memory_space<vmem>>, vector<32x32xf32>,
    return
  }
  func.func @transform_0(%arg0: i32) -> (i32, i32) {
    %c0_i32 = arith.constant 0 : i32
    %c0_i32_0 = arith.constant 0 : i32
    return %arg0, %c0_i32 : i32, i32
  }
  func.func @transform_1(%arg0: i32) -> (i32, i32) {
    %c0_i32 = arith.constant 0 : i32
    %c0_i32_0 = arith.constant 0 : i32
    %c0_i32_1 = arith.constant 0 : i32
    return %c0_i32, %c0_i32_0 : i32, i32
  }
  func.func @transform_2(%arg0: i32) -> (i32, i32) {
    %c0_i32 = arith.constant 0 : i32
    %c0_i32_0 = arith.constant 0 : i32
    %c0_i32_1 = arith.constant 0 : i32
    return %c0_i32, %c0_i32_0 : i32, i32
  }
  func.func @transform_3(%arg0: i32) -> (i32, i32) {
    %c0_i32 = arith.constant 0 : i32
    %c0_i32_0 = arith.constant 0 : i32
    %c0_i32_1 = arith.constant 0 : i32
    return %c0_i32, %c0_i32_0 : i32, i32
  }
  func.func @transform_4(%arg0: i32) -> (i32, i32) {
    %c0_i32 = arith.constant 0 : i32
    %c0_i32_0 = arith.constant 0 : i32
    return %arg0, %c0_i32 : i32, i32
  }
}

</mosaic_0001>

<llo_original>
// kernel: conv_module_forward.2
$region0: #{conv_module_forward.2}
  #allocation0 [shape = 'u32[]', space=smem, size = 0x4, offset = 0x4, fixed_abs, tag = 'smem constant byte address 0x4 - core index']
  #allocation1 [shape = 'u32[72,128]{1,0:T(1,128)}', space=vmem, size = 0x9000, scoped, tag = 'internal scratch']
  %s0 = inlined_call_operand.vmem [shape: f32[32,32], index: 0, kind: input, shape index: {}]
  %s1 = inlined_call_operand.vmem [shape: f32[1,32], index: 1, kind: input, shape index: {}]
  %s2 = inlined_call_operand.vmem [shape: f32[1,32], index: 2, kind: input, shape index: {}]
  %s3 = inlined_call_operand.vmem [shape: bf16[32,16], index: 3, kind: input, shape index: {}]
  %s4 = inlined_call_operand.vmem [shape: bf16[32,16], index: 4, kind: input, shape index: {}]
  %s5 = inlined_call_operand.vmem [shape: f32[3,16], index: 5, kind: input, shape index: {}]
  %s6 = inlined_call_operand.vmem [shape: f32[32,16], index: 6, kind: output, shape index: {0}]
  %s7 = inlined_call_operand.vmem [shape: f32[1,2,16], index: 7, kind: output, shape index: {1}]
  %8 = xla_tuple %s6, %s7
  %s9 = sld [smem:[#allocation0]]
  $region42: #{conv_module_forward.2} parent=0
    _
  %s11 = ssub.s32 1, %s9
  %s12 = scalar_select 0, %s11, %s9
  // Predicated region
  $region2: #{conv_module_forward.2} parent=0 // pred_check
    _
  $region3: #{conv_module_forward.2} parent=0 // pred_check_branch
    %14 = sbr.rel (0) target = $region5
  $region4: #{conv_module_forward.2} parent=0 // pred_region
    _
  $region5: #{conv_module_forward.2} parent=0 // pred_fallthru
    _
  // Predicated region
  $region6: #{conv_module_forward.2} parent=0 // pred_check
    _
  $region7: #{conv_module_forward.2} parent=0 // pred_check_branch
    %16 = sbr.rel (0) target = $region9
  $region8: #{conv_module_forward.2} parent=0 // pred_region
    _
  $region9: #{conv_module_forward.2} parent=0 // pred_fallthru
    _
  // Predicated region
  $region10: #{conv_module_forward.2} parent=0 // pred_check
    _
  $region11: #{conv_module_forward.2} parent=0 // pred_check_branch
    %18 = sbr.rel (0) target = $region13
  $region12: #{conv_module_forward.2} parent=0 // pred_region
    _
  $region13: #{conv_module_forward.2} parent=0 // pred_fallthru
    _
  // Predicated region
  $region14: #{conv_module_forward.2} parent=0 // pred_check
    _
  $region15: #{conv_module_forward.2} parent=0 // pred_check_branch
    %20 = sbr.rel (0) target = $region17
  $region16: #{conv_module_forward.2} parent=0 // pred_region
    _
  $region17: #{conv_module_forward.2} parent=0 // pred_fallthru
    _
  // Predicated region
  $region18: #{conv_module_forward.2} parent=0 // pred_check
    _
  $region19: #{conv_module_forward.2} parent=0 // pred_check_branch
    %22 = sbr.rel (0) target = $region21
  $region20: #{conv_module_forward.2} parent=0 // pred_region
    _
  $region21: #{conv_module_forward.2} parent=0 // pred_fallthru
    _
  // Predicated region
  $region22: #{conv_module_forward.2} parent=0 // pred_check
    _
  $region23: #{conv_module_forward.2} parent=0 // pred_check_branch
    %24 = sbr.rel (0) target = $region25
  $region24: #{conv_module_forward.2} parent=0 // pred_region
    _
  $region25: #{conv_module_forward.2} parent=0 // pred_fallthru
    _
  %v26 = vld [vmem:[%s0] sm:$0xff]
  %v27 = vld [vmem:[%s0 + $0x8] sm:$0xff]
  %v28 = vld [vmem:[%s0 + $0x10] sm:$0xff]
  %v29 = vld [vmem:[%s0 + $0x18] sm:$0xff]
  %vm30 = vcmask 261120
  %v31 = vsel %vm30, %v26, 0.0
  %32 = vadd.xlane.f32.xlu0 %v31
  %v33 = vpop.xlane.xlu0 %32
  %v34 = vsel %vm30, %v27, 0.0
  %35 = vadd.xlane.f32.xlu0 %v34
  %v36 = vpop.xlane.xlu0 %35
  %v37 = vsel %vm30, %v28, 0.0
  %38 = vadd.xlane.f32.xlu0 %v37
  %v39 = vpop.xlane.xlu0 %38
  %v40 = vsel %vm30, %v29, 0.0
  %41 = vadd.xlane.f32.xlu0 %v40
  %v42 = vpop.xlane.xlu0 %41
  %v43 = vrcp.pop 32.0
  %v44 = vmul.f32 32.0, %v43
  %v45 = vsub.f32 1.0, %v44
  %v46 = vmul.f32 %v43, %v45
  %v47 = vadd.f32 %v43, %v46
  %vm48 = vweird.f32 %v43
  %v49 = vsel %vm48, %v43, %v47
  %v50 = vmul.f32 %v33, %v49
  %v51 = vmul.f32 %v36, %v49
  %v52 = vmul.f32 %v39, %v49
  %v53 = vmul.f32 %v42, %v49
  %v54 = vsub.f32 %v26, %v50
  %v55 = vsub.f32 %v27, %v51
  %v56 = vsub.f32 %v28, %v52
  %v57 = vsub.f32 %v29, %v53
  %v58 = vmul.f32 %v54, %v54
  %v59 = vmul.f32 %v55, %v55
  %v60 = vmul.f32 %v56, %v56
  %v61 = vmul.f32 %v57, %v57
  %v62 = vsel %vm30, %v58, 0.0
  %63 = vadd.xlane.f32.xlu0 %v62
  %v64 = vpop.xlane.xlu0 %63
  %v65 = vsel %vm30, %v59, 0.0
  %66 = vadd.xlane.f32.xlu0 %v65
  %v67 = vpop.xlane.xlu0 %66
  %v68 = vsel %vm30, %v60, 0.0
  %69 = vadd.xlane.f32.xlu0 %v68
  %v70 = vpop.xlane.xlu0 %69
  %v71 = vsel %vm30, %v61, 0.0
  %72 = vadd.xlane.f32.xlu0 %v71
  %v73 = vpop.xlane.xlu0 %72
  %v74 = vmul.f32 %v64, %v49
  %v75 = vmul.f32 %v67, %v49
  %v76 = vmul.f32 %v70, %v49
  %v77 = vmul.f32 %v73, %v49
  %v78 = vadd.f32 %v74, 1e-05
  %v79 = vadd.f32 %v75, 1e-05
  %v80 = vadd.f32 %v76, 1e-05
  %v81 = vadd.f32 %v77, 1e-05
  %v82 = vrsqrt.pop %v78
  %v83 = vmul.f32 %v82, %v78
  %v84 = vmul.f32 %v83, %v82
  %v85 = vmul.f32 0.5, %v84
  %v86 = vsub.f32 1.5, %v85
  %v87 = vmul.f32 %v82, %v86
  %vm88 = vweird.f32 %v78
  %vm89 = vweird.f32 %v82
  %vm90 = vmor %vm88, %vm89
  %v91 = vsel %vm90, %v82, %v87
  %v92 = vrsqrt.pop %v79
  %v93 = vmul.f32 %v92, %v79
  %v94 = vmul.f32 %v93, %v92
  %v95 = vmul.f32 0.5, %v94
  %v96 = vsub.f32 1.5, %v95
  %v97 = vmul.f32 %v92, %v96
  %vm98 = vweird.f32 %v79
  %vm99 = vweird.f32 %v92
  %vm100 = vmor %vm98, %vm99
  %v101 = vsel %vm100, %v92, %v97
  %v102 = vrsqrt.pop %v80
  %v103 = vmul.f32 %v102, %v80
  %v104 = vmul.f32 %v103, %v102
  %v105 = vmul.f32 0.5, %v104
  %v106 = vsub.f32 1.5, %v105
  %v107 = vmul.f32 %v102, %v106
  %vm108 = vweird.f32 %v80
  %vm109 = vweird.f32 %v102
  %vm110 = vmor %vm108, %vm109
  %v111 = vsel %vm110, %v102, %v107
  %v112 = vrsqrt.pop %v81
  %v113 = vmul.f32 %v112, %v81
  %v114 = vmul.f32 %v113, %v112
  %v115 = vmul.f32 0.5, %v114
  %v116 = vsub.f32 1.5, %v115
  %v117 = vmul.f32 %v112, %v116
  %vm118 = vweird.f32 %v81
  %vm119 = vweird.f32 %v112
  %vm120 = vmor %vm118, %vm119
  %v121 = vsel %vm120, %v112, %v117
  %v122 = vmul.f32 %v54, %v91
  %v123 = vmul.f32 %v55, %v101
  %v124 = vmul.f32 %v56, %v111
  %v125 = vmul.f32 %v57, %v121
  %v126 = vld [vmem:[%s1] sm:$0x1]
  %v128 = vperm.slane %v126, 0
  %v130 = vmul.f32 %v122, %v128
  %v131 = vmul.f32 %v123, %v128
  %v132 = vmul.f32 %v124, %v128
  %v133 = vmul.f32 %v125, %v128
  %v134 = vld [vmem:[%s2] sm:$0x1]
  %v136 = vperm.slane %v134, 0
  %v138 = vadd.f32 %v130, %v136
  %v139 = vadd.f32 %v131, %v136
  %v140 = vadd.f32 %v132, %v136
  %v141 = vadd.f32 %v133, %v136
  %v142 = vpack.c.bf16 %v139, %v138
  %v143 = vpack.c.bf16 %v141, %v140
  %v144 = vld [vmem:[%s3] sm:$0xf]
  %v145 = vld [vmem:[%s3 + $0x4] sm:$0xf]
  %v146 = vld [vmem:[%s3 + $0x8] sm:$0xf]
  %v147 = vld [vmem:[%s3 + $0xc] sm:$0xf]
  %v152 = vunpack.c.l.b16 %v144
  %v153 = vunpack.c.l.b16 %v145
  %v154 = vunpack.c.l.b16 %v146
  %v155 = vunpack.c.l.b16 %v147
  %v156 = vpack.c.b16 %v153, %v152
  %v157 = vpack.c.b16 %v155, %v154
  %v161 = vsel %vm30, %v142, 0
  %v164 = vsel %vm30, %v143, 0
  %166 = vmatpush.bf16.msra.mxu0 0
  %167 = vmatpush.bf16.msra.mxu0 0
  %168 = vmatpush.bf16.msra.mxu0 0
  %169 = vmatpush.bf16.msra.mxu0 0
  %170 = vmatpush.bf16.msra.mxu0 0
  %171 = vmatpush.bf16.msra.mxu0 0
  %172 = vmatpush.bf16.msra.mxu0 %v157
  %173 = vmatpush.bf16.msra.mxu0 %v156
  %174 = vmatmul.bf16.gmra.mxu0 %v161
  %v175 = vpop.f32.mrf.mxu0
  %v176 = vadd.f32 0.0, %v175
  %v177 = vpop.f32.mrf.mxu0
  %v178 = vadd.f32 0.0, %v177
  %179 = vmatmul.bf16.gmra.mxu0 %v164
  %v180 = vpop.f32.mrf.mxu0
  %v181 = vadd.f32 0.0, %v180
  %v182 = vpop.f32.mrf.mxu0
  %v183 = vadd.f32 0.0, %v182
  %184 = vdwg.mxu0
  %v185 = vld [vmem:[%s4] sm:$0xf]
  %v186 = vld [vmem:[%s4 + $0x4] sm:$0xf]
  %v187 = vld [vmem:[%s4 + $0x8] sm:$0xf]
  %v188 = vld [vmem:[%s4 + $0xc] sm:$0xf]
  %v193 = vunpack.c.l.b16 %v185
  %v194 = vunpack.c.l.b16 %v186
  %v195 = vunpack.c.l.b16 %v187
  %v196 = vunpack.c.l.b16 %v188
  %v197 = vpack.c.b16 %v194, %v193
  %v198 = vpack.c.b16 %v196, %v195
  %201 = vmatpush.bf16.msra.mxu0 0
  %202 = vmatpush.bf16.msra.mxu0 0
  %203 = vmatpush.bf16.msra.mxu0 0
  %204 = vmatpush.bf16.msra.mxu0 0
  %205 = vmatpush.bf16.msra.mxu0 0
  %206 = vmatpush.bf16.msra.mxu0 0
  %207 = vmatpush.bf16.msra.mxu0 %v198
  %208 = vmatpush.bf16.msra.mxu0 %v197
  %209 = vmatmul.bf16.gmra.mxu0 %v161
  %v210 = vpop.f32.mrf.mxu0
  %v211 = vadd.f32 0.0, %v210
  %v212 = vpop.f32.mrf.mxu0
  %v213 = vadd.f32 0.0, %v212
  %214 = vmatmul.bf16.gmra.mxu0 %v164
  %v215 = vpop.f32.mrf.mxu0
  %v216 = vadd.f32 0.0, %v215
  %v217 = vpop.f32.mrf.mxu0
  %v218 = vadd.f32 0.0, %v217
  %219 = vdwg.mxu0
  %v220 = vxor.u32 %v211, 2147483648
  %v221 = vxor.u32 %v213, 2147483648
  %v222 = vxor.u32 %v216, 2147483648
  %v223 = vxor.u32 %v218, 2147483648
  %v224 = vmul.f32 %v220, 1.442695
  %v225 = vpow.pop %v224
  %v226 = vmul.f32 %v221, 1.442695
  %v227 = vpow.pop %v226
  %v228 = vmul.f32 %v222, 1.442695
  %v229 = vpow.pop %v228
  %v230 = vmul.f32 %v223, 1.442695
  %v231 = vpow.pop %v230
  %v232 = vadd.f32 %v225, 1.0
  %v233 = vadd.f32 %v227, 1.0
  %v234 = vadd.f32 %v229, 1.0
  %v235 = vadd.f32 %v231, 1.0
  %v236 = vrcp.pop %v232
  %v237 = vmul.f32 %v232, %v236
  %v238 = vsub.f32 1.0, %v237
  %v239 = vmul.f32 %v236, %v238
  %v240 = vadd.f32 %v236, %v239
  %vm241 = vweird.f32 %v232
  %vm242 = vweird.f32 %v236
  %vm243 = vmor %vm241, %vm242
  %v244 = vsel %vm243, %v236, %v240
  %v245 = vand.u32 2147483647, %v232
  %vm246 = vcmp.eq.f32.partialorder %v245, 8.507059e+37
  %v247 = vand.u32 %v232, 2147483648
  %v248 = vor.u32 1.1754944e-38, %v247
  %v249 = vsel %vm246, %v248, %v244
  %v250 = vmul.f32 1.0, %v249
  %v251 = vrcp.pop %v233
  %v252 = vmul.f32 %v233, %v251
  %v253 = vsub.f32 1.0, %v252
  %v254 = vmul.f32 %v251, %v253
  %v255 = vadd.f32 %v251, %v254
  %vm256 = vweird.f32 %v233
  %vm257 = vweird.f32 %v251
  %vm258 = vmor %vm256, %vm257
  %v259 = vsel %vm258, %v251, %v255
  %v260 = vand.u32 2147483647, %v233
  %vm261 = vcmp.eq.f32.partialorder %v260, 8.507059e+37
  %v262 = vand.u32 %v233, 2147483648
  %v263 = vor.u32 1.1754944e-38, %v262
  %v264 = vsel %vm261, %v263, %v259
  %v265 = vmul.f32 1.0, %v264
  %v266 = vrcp.pop %v234
  %v267 = vmul.f32 %v234, %v266
  %v268 = vsub.f32 1.0, %v267
  %v269 = vmul.f32 %v266, %v268
  %v270 = vadd.f32 %v266, %v269
  %vm271 = vweird.f32 %v234
  %vm272 = vweird.f32 %v266
  %vm273 = vmor %vm271, %vm272
  %v274 = vsel %vm273, %v266, %v270
  %v275 = vand.u32 2147483647, %v234
  %vm276 = vcmp.eq.f32.partialorder %v275, 8.507059e+37
  %v277 = vand.u32 %v234, 2147483648
  %v278 = vor.u32 1.1754944e-38, %v277
  %v279 = vsel %vm276, %v278, %v274
  %v280 = vmul.f32 1.0, %v279
  %v281 = vrcp.pop %v235
  %v282 = vmul.f32 %v235, %v281
  %v283 = vsub.f32 1.0, %v282
  %v284 = vmul.f32 %v281, %v283
  %v285 = vadd.f32 %v281, %v284
  %vm286 = vweird.f32 %v235
  %vm287 = vweird.f32 %v281
  %vm288 = vmor %vm286, %vm287
  %v289 = vsel %vm288, %v281, %v285
  %v290 = vand.u32 2147483647, %v235
  %vm291 = vcmp.eq.f32.partialorder %v290, 8.507059e+37
  %v292 = vand.u32 %v235, 2147483648
  %v293 = vor.u32 1.1754944e-38, %v292
  %v294 = vsel %vm291, %v293, %v289
  %v295 = vmul.f32 1.0, %v294
  %v296 = vmul.f32 %v176, %v250
  %v297 = vmul.f32 %v178, %v265
  %v298 = vmul.f32 %v181, %v280
  %v299 = vmul.f32 %v183, %v295
  %v300 = vld [vmem:[%s5] sm:$0x7]
  %v301 = vlaneseq
  %v302 = vshrl.u32 %v301, 7
  %v303 = vadd.s32 %v302, 8
  %v304 = vadd.s32 %v302, 16
  %v305 = vadd.s32 %v302, 24
  %vm306 = vcmp.lt.s32.totalorder %v302, 0
  %v307 = vsub.s32 0, %v302
  %v308 = vsel %vm306, %v307, %v302
  %v309 = vshrl.u32 %v308, 4
  %v310 = vand.u32 %v308, 15
  %v311 = vsub.s32 0, %v310
  %v312 = vsel %vm306, %v311, %v310
  %vm313 = vcmp.lt.s32.totalorder %v303, 0
  %v314 = vsub.s32 0, %v303
  %v315 = vsel %vm313, %v314, %v303
  %v316 = vshrl.u32 %v315, 4
  %v317 = vand.u32 %v315, 15
  %v318 = vsub.s32 0, %v317
  %v319 = vsel %vm313, %v318, %v317
  %vm320 = vcmp.lt.s32.totalorder %v304, 0
  %v321 = vsub.s32 0, %v304
  %v322 = vsel %vm320, %v321, %v304
  %v323 = vshrl.u32 %v322, 4
  %v324 = vand.u32 %v322, 15
  %v325 = vsub.s32 0, %v324
  %v326 = vsel %vm320, %v325, %v324
  %vm327 = vcmp.lt.s32.totalorder %v305, 0
  %v328 = vsub.s32 0, %v305
  %v329 = vsel %vm327, %v328, %v305
  %v330 = vshrl.u32 %v329, 4
  %v331 = vand.u32 %v329, 15
  %v332 = vsub.s32 0, %v331
  %v333 = vsel %vm327, %v332, %v331
  %vm334 = vcmp.ne.s32.totalorder %v312, 0
  %vm335 = vcmp.ne.s32.totalorder %v319, 0
  %vm336 = vcmp.ne.s32.totalorder %v326, 0
  %vm337 = vcmp.ne.s32.totalorder %v333, 0
  %vm338 = vcmp.lt.s32.totalorder %v312, 0
  %vm339 = vcmp.lt.s32.totalorder %v319, 0
  %vm340 = vcmp.lt.s32.totalorder %v326, 0
  %vm341 = vcmp.lt.s32.totalorder %v333, 0
  %vm342 = vmand %vm338, %vm334
  %vm343 = vmand %vm339, %vm335
  %vm344 = vmand %vm340, %vm336
  %vm345 = vmand %vm341, %vm337
  %v346 = vadd.s32 %v312, 16
  %v347 = vadd.s32 %v319, 16
  %v348 = vadd.s32 %v326, 16
  %v349 = vadd.s32 %v333, 16
  %v350 = vsel %vm342, %v346, %v312
  %v351 = vsel %vm343, %v347, %v319
  %v352 = vsel %vm344, %v348, %v326
  %v353 = vsel %vm345, %v349, %v333
  %v354 = vperm.slane %v300, 1
  %v355 = vmul.f32 %v296, %v354
  %v356 = vmul.f32 %v297, %v354
  %v357 = vmul.f32 %v298, %v354
  %v358 = vmul.f32 %v299, %v354
  %v359 = vrot.slane %v296, 7
  %v360 = vrot.slane %v297, 7
  %v361 = vrot.slane %v298, 7
  %v362 = vrot.slane %v299, 7
  %vm363 = vcmp.lt.s32.totalorder %v302, 1
  %v364 = vsel %vm363, %v361, %v362
  %v365 = vsel %vm363, %v360, %v361
  %v366 = vsel %vm363, %v359, %v360
  %v367 = vsel %vm363, %v362, %v359
  %v368 = vadd.s32 %v350, 4294967295
  %v369 = vadd.s32 %v351, 4294967295
  %v370 = vadd.s32 %v352, 4294967295
  %v371 = vadd.s32 %v353, 4294967295
  %vm372 = vcmp.ge.s32.totalorder %v368, 0
  %vm373 = vcmp.ge.s32.totalorder %v369, 0
  %vm374 = vcmp.ge.s32.totalorder %v370, 0
  %vm375 = vcmp.ge.s32.totalorder %v371, 0
  %vm376 = vcmp.lt.s32.totalorder %v368, 16
  %vm377 = vcmp.lt.s32.totalorder %v369, 16
  %vm378 = vcmp.lt.s32.totalorder %v370, 16
  %vm379 = vcmp.lt.s32.totalorder %v371, 16
  %vm380 = vmand %vm372, %vm376
  %vm381 = vmand %vm373, %vm377
  %vm382 = vmand %vm374, %vm378
  %vm383 = vmand %vm375, %vm379
  %v384 = vsel %vm380, %v367, 0.0
  %v385 = vsel %vm381, %v366, 0.0
  %v386 = vsel %vm382, %v365, 0.0
  %v387 = vsel %vm383, %v364, 0.0
  %v388 = vperm.slane %v300, 0
  %v389 = vmul.f32 %v384, %v388
  %v390 = vmul.f32 %v385, %v388
  %v391 = vmul.f32 %v386, %v388
  %v392 = vmul.f32 %v387, %v388
  %v393 = vadd.f32 %v355, %v389
  %v394 = vadd.f32 %v356, %v390
  %v395 = vadd.f32 %v357, %v391
  %v396 = vadd.f32 %v358, %v392
  %v397 = vrot.slane %v296, 1
  %v398 = vrot.slane %v297, 1
  %v399 = vrot.slane %v298, 1
  %v400 = vrot.slane %v299, 1
  %vm401 = vcmp.lt.s32.totalorder %v302, 7
  %v402 = vsel %vm401, %v399, %v400
  %v403 = vsel %vm401, %v398, %v399
  %v404 = vsel %vm401, %v397, %v398
  %v405 = vsel %vm401, %v400, %v397
  %v406 = vadd.s32 %v350, 1
  %v407 = vadd.s32 %v351, 1
  %v408 = vadd.s32 %v352, 1
  %v409 = vadd.s32 %v353, 1
  %vm410 = vcmp.ge.s32.totalorder %v406, 0
  %vm411 = vcmp.ge.s32.totalorder %v407, 0
  %vm412 = vcmp.ge.s32.totalorder %v408, 0
  %vm413 = vcmp.ge.s32.totalorder %v409, 0
  %vm414 = vcmp.lt.s32.totalorder %v406, 16
  %vm415 = vcmp.lt.s32.totalorder %v407, 16
  %vm416 = vcmp.lt.s32.totalorder %v408, 16
  %vm417 = vcmp.lt.s32.totalorder %v409, 16
  %vm418 = vmand %vm410, %vm414
  %vm419 = vmand %vm411, %vm415
  %vm420 = vmand %vm412, %vm416
  %vm421 = vmand %vm413, %vm417
  %v422 = vsel %vm418, %v404, 0.0
  %v423 = vsel %vm419, %v403, 0.0
  %v424 = vsel %vm420, %v402, 0.0
  %v425 = vsel %vm421, %v405, 0.0
  %v426 = vperm.slane %v300, 2
  %v427 = vmul.f32 %v422, %v426
  %v428 = vmul.f32 %v423, %v426
  %v429 = vmul.f32 %v424, %v426
  %v430 = vmul.f32 %v425, %v426
  %v431 = vadd.f32 %v393, %v427
  %v432 = vadd.f32 %v394, %v428
  %v433 = vadd.f32 %v395, %v429
  %v434 = vadd.f32 %v396, %v430
  %vm435 = vcmask 130048
  %436 = vst.msk [vmem:[%s6] sm:$0xff] %vm435, %v431
  %437 = vst.msk [vmem:[%s6 + $0x8] sm:$0xff] %vm435, %v432
  %438 = vst.msk [vmem:[%s6 + $0x10] sm:$0xff] %vm435, %v433
  %439 = vst.msk [vmem:[%s6 + $0x18] sm:$0xff] %vm435, %v434
  %v440 = vsel %vm435, %v431, 0.0
  %v441 = vsel %vm435, %v432, 0.0
  %v442 = vadd.f32 %v440, %v441
  %v443 = vsel %vm435, %v433, 0.0
  %v444 = vadd.f32 %v442, %v443
  %v445 = vsel %vm435, %v434, 0.0
  %v446 = vadd.f32 %v444, %v445
  %v447 = vrot.slane %v446, 4
  %v448 = vadd.f32 %v446, %v447
  %v449 = vrot.slane %v448, 2
  %v450 = vadd.f32 %v448, %v449
  %v451 = vrot.slane %v450, 1
  %v452 = vadd.f32 %v450, %v451
  %v453 = vmul.f32 %v431, %v431
  %v454 = vmul.f32 %v432, %v432
  %v455 = vmul.f32 %v433, %v433
  %v456 = vmul.f32 %v434, %v434
  %v457 = vsel %vm435, %v453, 0.0
  %v458 = vsel %vm435, %v454, 0.0
  %v459 = vadd.f32 %v457, %v458
  %v460 = vsel %vm435, %v455, 0.0
  %v461 = vadd.f32 %v459, %v460
  %v462 = vsel %vm435, %v456, 0.0
  %v463 = vadd.f32 %v461, %v462
  %v464 = vrot.slane %v463, 4
  %v465 = vadd.f32 %v463, %v464
  %v466 = vrot.slane %v465, 2
  %v467 = vadd.f32 %v465, %v466
  %v468 = vrot.slane %v467, 1
  %v469 = vadd.f32 %v467, %v468
  %vm470 = vcmask 1040384
  %v471 = vsel %vm470, %v452, %v469
  %vm472 = vcmask 123904
  %473 = vst.msk [vmem:[%s7] sm:$0x3] %vm472, %v471
  // Predicated region
  $region26: #{conv_module_forward.2} parent=0 // pred_check
    _
  $region27: #{conv_module_forward.2} parent=0 // pred_check_branch
    %475 = sbr.rel (0) target = $region29
  $region28: #{conv_module_forward.2} parent=0 // pred_region
    _
  $region29: #{conv_module_forward.2} parent=0 // pred_fallthru
    _
  // Predicated region
  $region30: #{conv_module_forward.2} parent=0 // pred_check
    _
  $region31: #{conv_module_forward.2} parent=0 // pred_check_branch
    %477 = sbr.rel (0) target = $region33
  $region32: #{conv_module_forward.2} parent=0 // pred_region
    _
  $region33: #{conv_module_forward.2} parent=0 // pred_fallthru
    _
  // Predicated region
  $region34: #{conv_module_forward.2} parent=0 // pred_check
    _
  $region35: #{conv_module_forward.2} parent=0 // pred_check_branch
    %479 = sbr.rel (0) target = $region37
  $region36: #{conv_module_forward.2} parent=0 // pred_region
    _
  $region37: #{conv_module_forward.2} parent=0 // pred_fallthru
    _
  // Predicated region
  $region38: #{conv_module_forward.2} parent=0 // pred_check
    _
  $region39: #{conv_module_forward.2} parent=0 // pred_check_branch
    %481 = sbr.rel (0) target = $region41
  $region40: #{conv_module_forward.2} parent=0 // pred_region
    _
  $region41: #{conv_module_forward.2} parent=0 // pred_fallthru
    _

// kernel: conv_module_forward.3
$region0: #{conv_module_forward.3}
  #allocation0 [shape = 'u32[]', space=smem, size = 0x4, offset = 0x4, fixed_abs, tag = 'smem constant byte address 0x4 - core index']
  #allocation1 [shape = 'u32[72,128]{1,0:T(1,128)}', space=vmem, size = 0x9000, scoped, tag = 'internal scratch']
  %s0 = inlined_call_operand.vmem [shape: f32[32,16], index: 0, kind: input, shape index: {}]
  %s1 = inlined_call_operand.vmem [shape: f32[1,16], index: 1, kind: input, shape index: {}]
  %s2 = inlined_call_operand.vmem [shape: f32[1,16], index: 2, kind: input, shape index: {}]
  %s3 = inlined_call_operand.vmem [shape: bf16[16,32], index: 3, kind: input, shape index: {}]
  %s4 = inlined_call_operand.hbm [shape: f32[32,32], index: 4, kind: output, shape index: {}]
  %s5 = sld [smem:[#allocation0]]
  $region26: #{conv_module_forward.3} parent=0
    _
  %s7 = ssub.s32 1, %s5
  %s8 = scalar_select 0, %s7, %s5
  $region1: #{conv_module_forward.3} parent=0
    #allocation2 [shape = 'u8[16384]{0}', space=vmem, size = 0x4000, scoped, tag = 'output window, operand 0, single buffered']
    #allocation3 [shape = 's32[1]{0}', space=sflag, size = 0x4, scoped, tag = 'scoped memory for conv_module_forward.3']
    %9 = vsyncpa [#allocation3], 0
    // Predicated region
    $region2: #{conv_module_forward.3} parent=1 // pred_check
      _
    $region3: #{conv_module_forward.3} parent=1 // pred_check_branch
      %11 = sbr.rel (0) target = $region5
    $region4: #{conv_module_forward.3} parent=1 // pred_region
      _
    $region5: #{conv_module_forward.3} parent=1 // pred_fallthru
      _
    // Predicated region
    $region6: #{conv_module_forward.3} parent=1 // pred_check
      _
    $region7: #{conv_module_forward.3} parent=1 // pred_check_branch
      %13 = sbr.rel (0) target = $region9
    $region8: #{conv_module_forward.3} parent=1 // pred_region
      _
    $region9: #{conv_module_forward.3} parent=1 // pred_fallthru
      _
    // Predicated region
    $region10: #{conv_module_forward.3} parent=1 // pred_check
      _
    $region11: #{conv_module_forward.3} parent=1 // pred_check_branch
      %15 = sbr.rel (0) target = $region13
    $region12: #{conv_module_forward.3} parent=1 // pred_region
      _
    $region13: #{conv_module_forward.3} parent=1 // pred_fallthru
      _
    // Predicated region
    $region14: #{conv_module_forward.3} parent=1 // pred_check
      _
    $region15: #{conv_module_forward.3} parent=1 // pred_check_branch
      %17 = sbr.rel (0) target = $region17
    $region16: #{conv_module_forward.3} parent=1 // pred_region
      _
    $region17: #{conv_module_forward.3} parent=1 // pred_fallthru
      _
    %v19 = vld [vmem:[%s0] sm:$0xff]
    %v20 = vld [vmem:[%s0 + $0x8] sm:$0xff]
    %v21 = vld [vmem:[%s0 + $0x10] sm:$0xff]
    %v22 = vld [vmem:[%s0 + $0x18] sm:$0xff]
    %v23 = vld [vmem:[%s1] sm:$0x1]
    %v25 = vperm.slane %v23, 0
    %v27 = vmul.f32 %v19, %v25
    %v28 = vmul.f32 %v20, %v25
    %v29 = vmul.f32 %v21, %v25
    %v30 = vmul.f32 %v22, %v25
    %v31 = vld [vmem:[%s2] sm:$0x1]
    %v33 = vperm.slane %v31, 0
    %v35 = vadd.f32 %v27, %v33
    %v36 = vadd.f32 %v28, %v33
    %v37 = vadd.f32 %v29, %v33
    %v38 = vadd.f32 %v30, %v33
    %v39 = vxor.u32 %v35, 2147483648
    %v40 = vxor.u32 %v36, 2147483648
    %v41 = vxor.u32 %v37, 2147483648
    %v42 = vxor.u32 %v38, 2147483648
    %v43 = vmul.f32 %v39, 1.442695
    %v44 = vpow.pop %v43
    %v45 = vmul.f32 %v40, 1.442695
    %v46 = vpow.pop %v45
    %v47 = vmul.f32 %v41, 1.442695
    %v48 = vpow.pop %v47
    %v49 = vmul.f32 %v42, 1.442695
    %v50 = vpow.pop %v49
    %v51 = vadd.f32 %v44, 1.0
    %v52 = vadd.f32 %v46, 1.0
    %v53 = vadd.f32 %v48, 1.0
    %v54 = vadd.f32 %v50, 1.0
    %v55 = vrcp.pop %v51
    %v56 = vmul.f32 %v51, %v55
    %v57 = vsub.f32 1.0, %v56
    %v58 = vmul.f32 %v55, %v57
    %v59 = vadd.f32 %v55, %v58
    %vm60 = vweird.f32 %v51
    %vm61 = vweird.f32 %v55
    %vm62 = vmor %vm60, %vm61
    %v63 = vsel %vm62, %v55, %v59
    %v64 = vand.u32 2147483647, %v51
    %vm65 = vcmp.eq.f32.partialorder %v64, 8.507059e+37
    %v66 = vand.u32 %v51, 2147483648
    %v67 = vor.u32 1.1754944e-38, %v66
    %v68 = vsel %vm65, %v67, %v63
    %v69 = vmul.f32 1.0, %v68
    %v70 = vrcp.pop %v52
    %v71 = vmul.f32 %v52, %v70
    %v72 = vsub.f32 1.0, %v71
    %v73 = vmul.f32 %v70, %v72
    %v74 = vadd.f32 %v70, %v73
    %vm75 = vweird.f32 %v52
    %vm76 = vweird.f32 %v70
    %vm77 = vmor %vm75, %vm76
    %v78 = vsel %vm77, %v70, %v74
    %v79 = vand.u32 2147483647, %v52
    %vm80 = vcmp.eq.f32.partialorder %v79, 8.507059e+37
    %v81 = vand.u32 %v52, 2147483648
    %v82 = vor.u32 1.1754944e-38, %v81
    %v83 = vsel %vm80, %v82, %v78
    %v84 = vmul.f32 1.0, %v83
    %v85 = vrcp.pop %v53
    %v86 = vmul.f32 %v53, %v85
    %v87 = vsub.f32 1.0, %v86
    %v88 = vmul.f32 %v85, %v87
    %v89 = vadd.f32 %v85, %v88
    %vm90 = vweird.f32 %v53
    %vm91 = vweird.f32 %v85
    %vm92 = vmor %vm90, %vm91
    %v93 = vsel %vm92, %v85, %v89
    %v94 = vand.u32 2147483647, %v53
    %vm95 = vcmp.eq.f32.partialorder %v94, 8.507059e+37
    %v96 = vand.u32 %v53, 2147483648
    %v97 = vor.u32 1.1754944e-38, %v96
    %v98 = vsel %vm95, %v97, %v93
    %v99 = vmul.f32 1.0, %v98
    %v100 = vrcp.pop %v54
    %v101 = vmul.f32 %v54, %v100
    %v102 = vsub.f32 1.0, %v101
    %v103 = vmul.f32 %v100, %v102
    %v104 = vadd.f32 %v100, %v103
    %vm105 = vweird.f32 %v54
    %vm106 = vweird.f32 %v100
    %vm107 = vmor %vm105, %vm106
    %v108 = vsel %vm107, %v100, %v104
    %v109 = vand.u32 2147483647, %v54
    %vm110 = vcmp.eq.f32.partialorder %v109, 8.507059e+37
    %v111 = vand.u32 %v54, 2147483648
    %v112 = vor.u32 1.1754944e-38, %v111
    %v113 = vsel %vm110, %v112, %v108
    %v114 = vmul.f32 1.0, %v113
    %v115 = vmul.f32 %v35, %v69
    %v116 = vmul.f32 %v36, %v84
    %v117 = vmul.f32 %v37, %v99
    %v118 = vmul.f32 %v38, %v114
    %v119 = vpack.c.bf16 %v116, %v115
    %v120 = vpack.c.bf16 %v118, %v117
    %v121 = vld [vmem:[%s3] sm:$0xf]
    %v122 = vld [vmem:[%s3 + $0x4] sm:$0xf]
    %v125 = vunpack.c.l.b16 %v121
    %v126 = vunpack.c.l.b16 %v122
    %v127 = vpack.c.b16 %v126, %v125
    %vm129 = vcmask 130048
    %v131 = vsel %vm129, %v119, 0
    %v134 = vsel %vm129, %v120, 0
    %136 = vmatpush.bf16.msra.mxu0 0
    %137 = vmatpush.bf16.msra.mxu0 0
    %138 = vmatpush.bf16.msra.mxu0 0
    %139 = vmatpush.bf16.msra.mxu0 0
    %140 = vmatpush.bf16.msra.mxu0 0
    %141 = vmatpush.bf16.msra.mxu0 0
    %142 = vmatpush.bf16.msra.mxu0 0
    %143 = vmatpush.bf16.msra.mxu0 %v127
    %144 = vmatmul.bf16.gmra.mxu0 %v131
    %v145 = vpop.f32.mrf.mxu0
    %v146 = vadd.f32 0.0, %v145
    %v147 = vpop.f32.mrf.mxu0
    %v148 = vadd.f32 0.0, %v147
    %149 = vmatmul.bf16.gmra.mxu0 %v134
    %v150 = vpop.f32.mrf.mxu0
    %v151 = vadd.f32 0.0, %v150
    %v152 = vpop.f32.mrf.mxu0
    %v153 = vadd.f32 0.0, %v152
    %154 = vdwg.mxu0
    %vm155 = vcmask 261120
    %156 = vst.msk [vmem:[#allocation2] sm:$0xff] %vm155, %v146
    %157 = vst.msk [vmem:[#allocation2 + $0x8] sm:$0xff] %vm155, %v148
    %158 = vst.msk [vmem:[#allocation2 + $0x10] sm:$0xff] %vm155, %v151
    %159 = vst.msk [vmem:[#allocation2 + $0x18] sm:$0xff] %vm155, %v153
    // Predicated region
    $region18: #{conv_module_forward.3} parent=1 // pred_check
      _
    $region19: #{conv_module_forward.3} parent=1 // pred_check_branch
      %161 = sbr.rel (0) target = $region21
    $region20: #{conv_module_forward.3} parent=1 // pred_region
      %163 = vsyncadd [#allocation3], 0
      %s164 = sshll.u32 [#allocation2], 4
      %s165 = int_to_ptr.vmem [resolvable:$true] %s164
      %s166 = sshll.u32 %s4, 4
      %s167 = int_to_ptr.hbm [resolvable:$true] %s166
      %172 = dma.vmem_to_hbm [thread:$0]  %s165, 512, %s167, [#allocation3], 128, 128, 8
    $region21: #{conv_module_forward.3} parent=1 // pred_fallthru
      _
    // Predicated region
    $region22: #{conv_module_forward.3} parent=1 // pred_check
      _
    $region23: #{conv_module_forward.3} parent=1 // pred_check_branch
      %174 = sbr.rel (0) target = $region25
    $region24: #{conv_module_forward.3} parent=1 // pred_region
      %176 = dma.done [#allocation3], 512
    $region25: #{conv_module_forward.3} parent=1 // pred_fallthru
      _
    %177 = vsyncpa [#allocation3], 1

</llo_original>
